<compile_context>
chip_gen: v7x
topology: tpu7x:2x2x1
jax: 0.10.0
libtpu: 0.0.40
codegen_flags: <defaults>
</compile_context>

<pallas_src>
import functools

import jax
import jax.numpy as jnp
from jax.experimental import pallas as pl
from jax.experimental.pallas import tpu as pltpu


NEG_SLOPE = 0.01  # torch.nn.functional.leaky_relu default


def _leaky_relu(x):
    return jnp.where(x >= 0, x, NEG_SLOPE * x)


def _round_up(x, m):
    return (x + m - 1) // m * m


def _vmem_capacity_bytes():
    """Physical VMEM of the current chip; conservative 64 MiB if unknown."""
    try:
        info = pltpu.get_tpu_info()
        cap = getattr(info, "vmem_capacity_bytes", None)
        if cap:
            return int(cap)
    except Exception:
        pass
    return 64 << 20


def _vmem_footprint_bytes(block_b, in_dim, hid, out_dim, mm_bytes):
    """True VMEM footprint: 2x x/out tiles, 1x resident weights/biases."""
    def tile(r, c, nbytes, sub):
        return _round_up(max(r, 1), sub) * _round_up(max(c, 1), 128) * nbytes

    sub_mm = 8 * (4 // mm_bytes)               # f32 -> 8 sublanes, bf16 -> 16
    return (
        2 * tile(block_b, in_dim, 4, 8)         # x tile (f32, double-buffered)
        + tile(in_dim, hid, mm_bytes, sub_mm)   # W1 (resident, single buffer)
        + tile(1, hid, 4, 8)                    # b1
        + tile(hid, out_dim, mm_bytes, sub_mm)  # W2 (resident, single buffer)
        + tile(1, out_dim, 4, 8)                # b2
        + 2 * tile(block_b, out_dim, 4, 8)      # out tile (f32, double-buffered)
    )


def _choose_block_b(B, in_dim, hid, out_dim, mm_bytes, vmem_cap):
    """Batch tile: multiple of 8 sublanes, capped by chip VMEM capacity."""
    cap_rows = 1024 if vmem_cap >= (96 << 20) else 512   # v5e/v6e vs v7x
    b = max(8, _round_up(min(max(B, 1), cap_rows), 8))
    budget = min(vmem_cap * 3 // 4, 96 << 20)
    while b > 8 and (_vmem_footprint_bytes(b, in_dim, hid, out_dim, mm_bytes)
                     + (8 << 20)) > budget:
        b = max(8, _round_up(b // 2, 8))
    return b


def _vmem_limit_bytes(block_b, in_dim, hid, out_dim, mm_bytes, vmem_cap):
    fp = _vmem_footprint_bytes(block_b, in_dim, hid, out_dim, mm_bytes)
    limit = max(fp + (8 << 20), 16 << 20)
    return int(min(limit, min(vmem_cap * 3 // 4, 96 << 20)))


def _resident_spec(block_shape, single_buffer):
    """Constant-index BlockSpec; single-buffered where pipeline_mode exists."""
    index_map = lambda i: (0, 0)
    if single_buffer:
        buffered_cls = getattr(pl, "Buffered", None)
        if buffered_cls is not None:
            try:
                return pl.BlockSpec(block_shape, index_map,
                                    pipeline_mode=buffered_cls(1))
            except TypeError:
                pass
    return pl.BlockSpec(block_shape, index_map)


def mlp_split_kernel(x_ref, w1_ref, b1_ref, w2_ref, b2_ref, o_ref):
    # Layer 1: cast x to the MXU dtype in-kernel (saves a full wrapper HBM
    # read+write pass over x); f32 accumulation; bias + LeakyReLU in f32.
    h = jnp.dot(x_ref[...].astype(w1_ref.dtype), w1_ref[...],
                preferred_element_type=jnp.float32)
    h = _leaky_relu(h + b1_ref[...])

    # TODO(synk): nn.Dropout(p=0.3) is identity in eval mode; training-mode
    # stochastic masking (pltpu.prng_* + 1/(1-p) scaling) is not applied here.

    # Layer 2: cast activations to the MXU dtype only at the matmul input.
    y = jnp.dot(h.astype(w2_ref.dtype), w2_ref[...],
                preferred_element_type=jnp.float32)
    o_ref[...] = _leaky_relu(y + b2_ref[...]).astype(o_ref.dtype)


@functools.partial(
    jax.jit,
    static_argnames=("block_b", "matmul_dtype", "out_dtype",
                     "vmem_limit_bytes", "single_buffer_weights"))
def _forward_impl(x, w1, b1, w2, b2, *, block_b, matmul_dtype, out_dtype,
                  vmem_limit_bytes, single_buffer_weights):
    B, in_dim = x.shape
    hid = w1.shape[1]
    out_dim = w2.shape[1]

    # Weights are tiny and read once (resident); cast them in the wrapper.
    # Biases stay f32 (added after the f32 accumulation). x stays f32.
    w1_c = w1.astype(matmul_dtype)
    w2_c = w2.astype(matmul_dtype)
    b1_r = b1.reshape(1, hid).astype(jnp.float32)
    b2_r = b2.reshape(1, out_dim).astype(jnp.float32)

    grid = (pl.cdiv(B, block_b),)   # no explicit batch pad; tail block masked

    return pl.pallas_call(
        mlp_split_kernel,
        out_shape=jax.ShapeDtypeStruct((B, out_dim), out_dtype),
        grid_spec=pltpu.PrefetchScalarGridSpec(
            num_scalar_prefetch=0,
            grid=grid,
            in_specs=[
                pl.BlockSpec((block_b, in_dim), lambda i: (i, 0)),       # x
                _resident_spec((in_dim, hid), single_buffer_weights),    # W1
                _resident_spec((1, hid), single_buffer_weights),         # b1
                _resident_spec((hid, out_dim), single_buffer_weights),   # W2
                _resident_spec((1, out_dim), single_buffer_weights),     # b2
            ],
            out_specs=pl.BlockSpec((block_b, out_dim), lambda i: (i, 0)),
        ),
        compiler_params=pltpu.CompilerParams(
            dimension_semantics=("parallel",),
            vmem_limit_bytes=vmem_limit_bytes,
        ),
    )(x, w1_c, b1_r, w2_c, b2_r)


def regression_mlp_split_forward(x, w1, b1, w2, b2, *, block_b=None,
                                 matmul_dtype=jnp.bfloat16,
                                 out_dtype=jnp.float32):
    """x: (B, input_dim) f32.  Returns (B, output_dim) `out_dtype`."""
    B, in_dim = x.shape
    hid = w1.shape[1]
    out_dim = w2.shape[1]
    mm_bytes = jnp.dtype(matmul_dtype).itemsize

    # TODO(synk): for very large input_dim (W1 ~ in_dim*hid no longer resident
    # in VMEM, especially v7x's 64 MiB) a K-tiled grid axis over in_dim with a
    # f32 VMEM accumulator (pl.when init/finalize) would be needed.

    vmem_cap = _vmem_capacity_bytes()
    if block_b is None:
        block_b = _choose_block_b(B, in_dim, hid, out_dim, mm_bytes, vmem_cap)
    block_b = max(8, _round_up(block_b, 8))
    vmem_limit = _vmem_limit_bytes(block_b, in_dim, hid, out_dim, mm_bytes,
                                   vmem_cap)

    kwargs = dict(block_b=block_b, matmul_dtype=matmul_dtype,
                  out_dtype=out_dtype, vmem_limit_bytes=vmem_limit)
    try:
        # Preferred path: single-buffered resident weights (halves their VMEM).
        out = _forward_impl(x, w1, b1, w2, b2, single_buffer_weights=True,
                            **kwargs)
        return jax.block_until_ready(out)
    except Exception:
        # Fallback if this JAX build rejects pipeline_mode=pl.Buffered(1).
        return _forward_impl(x, w1, b1, w2, b2, single_buffer_weights=False,
                             **kwargs)


def init_params(key, input_dim, output_dim):
    """Deterministic init mimicking nn.Linear's uniform(+-1/sqrt(fan_in))."""
    hid = input_dim // 2
    k1, k2, k3, k4 = jax.random.split(key, 4)
    bound1 = 1.0 / jnp.sqrt(input_dim)
    bound2 = 1.0 / jnp.sqrt(hid)
    # Weights stored as (in_features, out_features) = transpose of torch layout.
    w1 = jax.random.uniform(k1, (input_dim, hid), jnp.float32, -bound1, bound1)
    b1 = jax.random.uniform(k2, (hid,), jnp.float32, -bound1, bound1)
    w2 = jax.random.uniform(k3, (hid, output_dim), jnp.float32, -bound2, bound2)
    b2 = jax.random.uniform(k4, (output_dim,), jnp.float32, -bound2, bound2)
    return w1, b1, w2, b2


def reference_forward_f32(x, w1, b1, w2, b2):
    h = _leaky_relu(x @ w1 + b1)
    return _leaky_relu(h @ w2 + b2)


def reference_forward_bf16(x, w1, b1, w2, b2):
    """Emulates the kernel's numerics: bf16 MXU inputs, f32 accumulation."""
    h = jnp.dot(x.astype(jnp.bfloat16), w1.astype(jnp.bfloat16),
                preferred_element_type=jnp.float32)
    h = _leaky_relu(h + b1)
    y = jnp.dot(h.astype(jnp.bfloat16), w2.astype(jnp.bfloat16),
                preferred_element_type=jnp.float32)
    return _leaky_relu(y + b2)


if __name__ == "__main__":
    input_dim = 32
    output_dim = 8
    batch = 32

    key = jax.random.PRNGKey(0)
    kx, kx2, kp = jax.random.split(key, 3)
    x = jax.random.normal(kx, (batch, input_dim), jnp.float32)
    w1, b1, w2, b2 = init_params(kp, input_dim, output_dim)

    out = regression_mlp_split_forward(x, w1, b1, w2, b2)
    out = jax.block_until_ready(out)
    assert out.shape == (batch, output_dim)

    ref_bf16 = reference_forward_bf16(x, w1, b1, w2, b2)
    ref_f32 = reference_forward_f32(x, w1, b1, w2, b2)
    assert jnp.allclose(out, ref_bf16, atol=1e-2, rtol=1e-2), \
        "mismatch vs bf16-emulated JAX reference"
    assert jnp.allclose(out, ref_f32, atol=5e-2, rtol=5e-2), \
        "mismatch vs f32 JAX reference"

    # Tail-block check: batch not a multiple of 8, so the final grid block is
    # padded by Pallas and its extra rows are masked on writeback (each output
    # row only depends on its own input row, so garbage pad rows are harmless).
    batch_odd = 27
    x_odd = jax.random.normal(kx2, (batch_odd, input_dim), jnp.float32)
    out_odd = jax.block_until_ready(
        regression_mlp_split_forward(x_odd, w1, b1, w2, b2))
    assert out_odd.shape == (batch_odd, output_dim)
    ref_odd = reference_forward_bf16(x_odd, w1, b1, w2, b2)
    assert jnp.allclose(out_odd, ref_odd, atol=1e-2, rtol=1e-2), \
        "mismatch on non-multiple-of-8 batch (tail block)"

    print("KERNEL_OK")
</pallas_src>

<mosaic_0001>
module attributes {stable_mosaic.version = 11 : i64} {
  func.func @mlp_split_kernel(%arg0: i32, %arg1: memref<32x32xf32, #tpu.memory_space<vmem>>, %arg2: memref<32x16xbf16, #tpu.memory_space<vmem>>, %arg3: memref<1x16xf32, #tpu.memory_space<vmem>>, %arg4: memref<16x8xbf16, #tpu.memory_space<vmem>>, %arg5: memref<1x8xf32, #tpu.memory_space<vmem>>, %arg6: memref<32x8xf32, #tpu.memory_space<vmem>>) attributes {dimension_semantics = [#tpu.dimension_semantics<parallel>], iteration_bounds = array<i64: 1>, scalar_prefetch = 0 : i64, scratch_operands = 0 : i64, tpu.core_type = #tpu.core_type<tc>, window_params = [{transform_indices = @transform_0, window_bounds = array<i64: 32, 32>}, {pipeline_mode = #tpu.pipeline_mode<synchronous>, transform_indices = @transform_1, window_bounds = array<i64: 32, 16>}, {pipeline_mode = #tpu.pipeline_mode<synchronous>, transform_indices = @transform_2, window_bounds = array<i64: 1, 16>}, {pipeline_mode = #tpu.pipeline_mode<synchronous>, transform_indices = @transform_3, window_bounds = array<i64: 16, 8>}, {pipeline_mode = #tpu.pipeline_mode<synchronous>, transform_indices = @transform_4, window_bounds = array<i64: 1, 8>}, {transform_indices = @transform_5, window_bounds = array<i64: 32, 8>}]} {
    %c0 = arith.constant 0 : index
    %c0_0 = arith.constant 0 : index
    %0 = vector.load %arg1[%c0, %c0_0] : memref<32x32xf32, #tpu.memory_space<vmem>>, vector<32x32xf32>
    %1 = arith.truncf %0 : vector<32x32xf32> to vector<32x32xbf16>
    %c0_1 = arith.constant 0 : index
    %c0_2 = arith.constant 0 : index
    %2 = vector.load %arg2[%c0_1, %c0_2] : memref<32x16xbf16, #tpu.memory_space<vmem>>, vector<32x16xbf16>
    %cst = arith.constant dense<0.000000e+00> : vector<32x16xf32>
    %3 = tpu.matmul %1, %2, %cst {dimension_numbers = #tpu.dot_dimension_numbers<[1], [0], [0], [1], [0, 0, 1, 1], [], []>} : vector<32x32xbf16>, vector<32x16xbf16>, vector<32x16xf32> -> vector<32x16xf32>
    %c0_3 = arith.constant 0 : index
    %c0_4 = arith.constant 0 : index
    %4 = vector.load %arg3[%c0_3, %c0_4] : memref<1x16xf32, #tpu.memory_space<vmem>>, vector<1x16xf32>
    %5 = vector.broadcast %4 : vector<1x16xf32> to vector<32x16xf32>
    %6 = arith.addf %3, %5 : vector<32x16xf32>
    %cst_5 = arith.constant 0.000000e+00 : f32
    %7 = vector.broadcast %cst_5 : f32 to vector<32x16xf32>
    %8 = arith.cmpf oge, %6, %7 : vector<32x16xf32>
    %cst_6 = arith.constant 0.00999999977 : f32
    %9 = vector.broadcast %cst_6 : f32 to vector<32x16xf32>
    %10 = arith.mulf %9, %6 : vector<32x16xf32>
    %11 = arith.select %8, %6, %10 : vector<32x16xi1>, vector<32x16xf32>
    %12 = arith.truncf %11 : vector<32x16xf32> to vector<32x16xbf16>
    %c0_7 = arith.constant 0 : index
    %c0_8 = arith.constant 0 : index
    %13 = vector.load %arg4[%c0_7, %c0_8] : memref<16x8xbf16, #tpu.memory_space<vmem>>, vector<16x8xbf16>
    %cst_9 = arith.constant dense<0.000000e+00> : vector<32x8xf32>
    %14 = tpu.matmul %12, %13, %cst_9 {dimension_numbers = #tpu.dot_dimension_numbers<[1], [0], [0], [1], [0, 0, 1, 1], [], []>} : vector<32x16xbf16>, vector<16x8xbf16>, vector<32x8xf32> -> vector<32x8xf32>
    %c0_10 = arith.constant 0 : index
    %c0_11 = arith.constant 0 : index
    %15 = vector.load %arg5[%c0_10, %c0_11] : memref<1x8xf32, #tpu.memory_space<vmem>>, vector<1x8xf32>
    %16 = vector.broadcast %15 : vector<1x8xf32> to vector<32x8xf32>
    %17 = arith.addf %14, %16 : vector<32x8xf32>
    %cst_12 = arith.constant 0.000000e+00 : f32
    %18 = vector.broadcast %cst_12 : f32 to vector<32x8xf32>
    %19 = arith.cmpf oge, %17, %18 : vector<32x8xf32>
    %cst_13 = arith.constant 0.00999999977 : f32
    %20 = vector.broadcast %cst_13 : f32 to vector<32x8xf32>
    %21 = arith.mulf %20, %17 : vector<32x8xf32>
    %22 = arith.select %19, %17, %21 : vector<32x8xi1>, vector<32x8xf32>
    %c0_14 = arith.constant 0 : index
    %c0_15 = arith.constant 0 : index
    %23 = vector.load %arg6[%c0_14, %c0_15] : memref<32x8xf32, #tpu.memory_space<vmem>>, vector<32x8xf32>
    tpu.vector_store %arg6[%c0_14, %c0_15], %22 {strides = array<i32>} : memref<32x8xf32, #tpu.memory_space<vmem>>, vector<32x8xf32>,
    return
  }
  func.func @transform_0(%arg0: i32) -> (i32, i32) {
    %c0_i32 = arith.constant 0 : i32
    %c0_i32_0 = arith.constant 0 : i32
    return %arg0, %c0_i32 : i32, i32
  }
  func.func @transform_1(%arg0: i32) -> (i32, i32) {
    %c0_i32 = arith.constant 0 : i32
    %c0_i32_0 = arith.constant 0 : i32
    %c0_i32_1 = arith.constant 0 : i32
    return %c0_i32, %c0_i32_0 : i32, i32
  }
  func.func @transform_2(%arg0: i32) -> (i32, i32) {
    %c0_i32 = arith.constant 0 : i32
    %c0_i32_0 = arith.constant 0 : i32
    %c0_i32_1 = arith.constant 0 : i32
    return %c0_i32, %c0_i32_0 : i32, i32
  }
  func.func @transform_3(%arg0: i32) -> (i32, i32) {
    %c0_i32 = arith.constant 0 : i32
    %c0_i32_0 = arith.constant 0 : i32
    %c0_i32_1 = arith.constant 0 : i32
    return %c0_i32, %c0_i32_0 : i32, i32
  }
  func.func @transform_4(%arg0: i32) -> (i32, i32) {
    %c0_i32 = arith.constant 0 : i32
    %c0_i32_0 = arith.constant 0 : i32
    %c0_i32_1 = arith.constant 0 : i32
    return %c0_i32, %c0_i32_0 : i32, i32
  }
  func.func @transform_5(%arg0: i32) -> (i32, i32) {
    %c0_i32 = arith.constant 0 : i32
    %c0_i32_0 = arith.constant 0 : i32
    return %arg0, %c0_i32 : i32, i32
  }
}

module attributes {stable_mosaic.version = 11 : i64} {
  func.func @mlp_split_kernel(%arg0: i32, %arg1: memref<32x32xf32, #tpu.memory_space<vmem>>, %arg2: memref<32x16xbf16, #tpu.memory_space<vmem>>, %arg3: memref<1x16xf32, #tpu.memory_space<vmem>>, %arg4: memref<16x8xbf16, #tpu.memory_space<vmem>>, %arg5: memref<1x8xf32, #tpu.memory_space<vmem>>, %arg6: memref<32x8xf32, #tpu.memory_space<vmem>>) attributes {dimension_semantics = [#tpu.dimension_semantics<parallel>], iteration_bounds = array<i64: 1>, scalar_prefetch = 0 : i64, scratch_operands = 0 : i64, tpu.core_type = #tpu.core_type<tc>, window_params = [{transform_indices = @transform_0, window_bounds = array<i64: 32, 32>}, {pipeline_mode = #tpu.pipeline_mode<synchronous>, transform_indices = @transform_1, window_bounds = array<i64: 32, 16>}, {pipeline_mode = #tpu.pipeline_mode<synchronous>, transform_indices = @transform_2, window_bounds = array<i64: 1, 16>}, {pipeline_mode = #tpu.pipeline_mode<synchronous>, transform_indices = @transform_3, window_bounds = array<i64: 16, 8>}, {pipeline_mode = #tpu.pipeline_mode<synchronous>, transform_indices = @transform_4, window_bounds = array<i64: 1, 8>}, {transform_indices = @transform_5, window_bounds = array<i64: 32, 8>}]} {
    %c0 = arith.constant 0 : index
    %c0_0 = arith.constant 0 : index
    %0 = vector.load %arg1[%c0, %c0_0] : memref<32x32xf32, #tpu.memory_space<vmem>>, vector<32x32xf32>
    %1 = arith.truncf %0 : vector<32x32xf32> to vector<32x32xbf16>
    %c0_1 = arith.constant 0 : index
    %c0_2 = arith.constant 0 : index
    %2 = vector.load %arg2[%c0_1, %c0_2] : memref<32x16xbf16, #tpu.memory_space<vmem>>, vector<32x16xbf16>
    %cst = arith.constant dense<0.000000e+00> : vector<32x16xf32>
    %3 = tpu.matmul %1, %2, %cst {dimension_numbers = #tpu.dot_dimension_numbers<[1], [0], [0], [1], [0, 0, 1, 1], [], []>} : vector<32x32xbf16>, vector<32x16xbf16>, vector<32x16xf32> -> vector<32x16xf32>
    %c0_3 = arith.constant 0 : index
    %c0_4 = arith.constant 0 : index
    %4 = vector.load %arg3[%c0_3, %c0_4] : memref<1x16xf32, #tpu.memory_space<vmem>>, vector<1x16xf32>
    %5 = vector.broadcast %4 : vector<1x16xf32> to vector<32x16xf32>
    %6 = arith.addf %3, %5 : vector<32x16xf32>
    %cst_5 = arith.constant 0.000000e+00 : f32
    %7 = vector.broadcast %cst_5 : f32 to vector<32x16xf32>
    %8 = arith.cmpf oge, %6, %7 : vector<32x16xf32>
    %cst_6 = arith.constant 0.00999999977 : f32
    %9 = vector.broadcast %cst_6 : f32 to vector<32x16xf32>
    %10 = arith.mulf %9, %6 : vector<32x16xf32>
    %11 = arith.select %8, %6, %10 : vector<32x16xi1>, vector<32x16xf32>
    %12 = arith.truncf %11 : vector<32x16xf32> to vector<32x16xbf16>
    %c0_7 = arith.constant 0 : index
    %c0_8 = arith.constant 0 : index
    %13 = vector.load %arg4[%c0_7, %c0_8] : memref<16x8xbf16, #tpu.memory_space<vmem>>, vector<16x8xbf16>
    %cst_9 = arith.constant dense<0.000000e+00> : vector<32x8xf32>
    %14 = tpu.matmul %12, %13, %cst_9 {dimension_numbers = #tpu.dot_dimension_numbers<[1], [0], [0], [1], [0, 0, 1, 1], [], []>} : vector<32x16xbf16>, vector<16x8xbf16>, vector<32x8xf32> -> vector<32x8xf32>
    %c0_10 = arith.constant 0 : index
    %c0_11 = arith.constant 0 : index
    %15 = vector.load %arg5[%c0_10, %c0_11] : memref<1x8xf32, #tpu.memory_space<vmem>>, vector<1x8xf32>
    %16 = vector.broadcast %15 : vector<1x8xf32> to vector<32x8xf32>
    %17 = arith.addf %14, %16 : vector<32x8xf32>
    %cst_12 = arith.constant 0.000000e+00 : f32
    %18 = vector.broadcast %cst_12 : f32 to vector<32x8xf32>
    %19 = arith.cmpf oge, %17, %18 : vector<32x8xf32>
    %cst_13 = arith.constant 0.00999999977 : f32
    %20 = vector.broadcast %cst_13 : f32 to vector<32x8xf32>
    %21 = arith.mulf %20, %17 : vector<32x8xf32>
    %22 = arith.select %19, %17, %21 : vector<32x8xi1>, vector<32x8xf32>
    %c0_14 = arith.constant 0 : index
    %c0_15 = arith.constant 0 : index
    %23 = vector.load %arg6[%c0_14, %c0_15] : memref<32x8xf32, #tpu.memory_space<vmem>>, vector<32x8xf32>
    tpu.vector_store %arg6[%c0_14, %c0_15], %22 {strides = array<i32>} : memref<32x8xf32, #tpu.memory_space<vmem>>, vector<32x8xf32>,
    return
  }
  func.func @transform_0(%arg0: i32) -> (i32, i32) {
    %c0_i32 = arith.constant 0 : i32
    %c0_i32_0 = arith.constant 0 : i32
    return %arg0, %c0_i32 : i32, i32
  }
  func.func @transform_1(%arg0: i32) -> (i32, i32) {
    %c0_i32 = arith.constant 0 : i32
    %c0_i32_0 = arith.constant 0 : i32
    %c0_i32_1 = arith.constant 0 : i32
    return %c0_i32, %c0_i32_0 : i32, i32
  }
  func.func @transform_2(%arg0: i32) -> (i32, i32) {
    %c0_i32 = arith.constant 0 : i32
    %c0_i32_0 = arith.constant 0 : i32
    %c0_i32_1 = arith.constant 0 : i32
    return %c0_i32, %c0_i32_0 : i32, i32
  }
  func.func @transform_3(%arg0: i32) -> (i32, i32) {
    %c0_i32 = arith.constant 0 : i32
    %c0_i32_0 = arith.constant 0 : i32
    %c0_i32_1 = arith.constant 0 : i32
    return %c0_i32, %c0_i32_0 : i32, i32
  }
  func.func @transform_4(%arg0: i32) -> (i32, i32) {
    %c0_i32 = arith.constant 0 : i32
    %c0_i32_0 = arith.constant 0 : i32
    %c0_i32_1 = arith.constant 0 : i32
    return %c0_i32, %c0_i32_0 : i32, i32
  }
  func.func @transform_5(%arg0: i32) -> (i32, i32) {
    %c0_i32 = arith.constant 0 : i32
    %c0_i32_0 = arith.constant 0 : i32
    return %arg0, %c0_i32 : i32, i32
  }
}

</mosaic_0001>

<llo_original>
// kernel: _forward_impl.1
$region0: #{_forward_impl.1}
  #allocation0 [shape = 'u32[]', space=smem, size = 0x4, offset = 0x4, fixed_abs, tag = 'smem constant byte address 0x4 - core index']
  #allocation1 [shape = 'u32[144,128]{1,0:T(1,128)}', space=vmem, size = 0x12000, scoped, tag = 'internal scratch']
  %s0 = inlined_call_operand.vmem [shape: f32[32,32], index: 0, kind: input, shape index: {}]
  %s1 = inlined_call_operand.vmem [shape: bf16[32,16], index: 1, kind: input, shape index: {}]
  %s2 = inlined_call_operand.vmem [shape: f32[1,16], index: 2, kind: input, shape index: {}]
  %s3 = inlined_call_operand.vmem [shape: bf16[16,8], index: 3, kind: input, shape index: {}]
  %s4 = inlined_call_operand.vmem [shape: f32[1,8], index: 4, kind: input, shape index: {}]
  %s5 = inlined_call_operand.vmem [shape: f32[32,8], index: 5, kind: output, shape index: {}]
  %s6 = sld [smem:[#allocation0]]
  $region30: #{_forward_impl.1} parent=0
    _
  %s8 = ssub.s32 1, %s6
  %s9 = scalar_select 0, %s8, %s6
  // Predicated region
  $region2: #{_forward_impl.1} parent=0 // pred_check
    _
  $region3: #{_forward_impl.1} parent=0 // pred_check_branch
    %11 = sbr.rel (0) target = $region5
  $region4: #{_forward_impl.1} parent=0 // pred_region
    _
  $region5: #{_forward_impl.1} parent=0 // pred_fallthru
    _
  // Predicated region
  $region6: #{_forward_impl.1} parent=0 // pred_check
    _
  $region7: #{_forward_impl.1} parent=0 // pred_check_branch
    %13 = sbr.rel (0) target = $region9
  $region8: #{_forward_impl.1} parent=0 // pred_region
    _
  $region9: #{_forward_impl.1} parent=0 // pred_fallthru
    _
  // Predicated region
  $region10: #{_forward_impl.1} parent=0 // pred_check
    _
  $region11: #{_forward_impl.1} parent=0 // pred_check_branch
    %15 = sbr.rel (0) target = $region13
  $region12: #{_forward_impl.1} parent=0 // pred_region
    _
  $region13: #{_forward_impl.1} parent=0 // pred_fallthru
    _
  // Predicated region
  $region14: #{_forward_impl.1} parent=0 // pred_check
    _
  $region15: #{_forward_impl.1} parent=0 // pred_check_branch
    %17 = sbr.rel (0) target = $region17
  $region16: #{_forward_impl.1} parent=0 // pred_region
    _
  $region17: #{_forward_impl.1} parent=0 // pred_fallthru
    _
  // Predicated region
  $region18: #{_forward_impl.1} parent=0 // pred_check
    _
  $region19: #{_forward_impl.1} parent=0 // pred_check_branch
    %19 = sbr.rel (0) target = $region21
  $region20: #{_forward_impl.1} parent=0 // pred_region
    _
  $region21: #{_forward_impl.1} parent=0 // pred_fallthru
    _
  %v21 = vld [vmem:[%s0] sm:$0xff]
  %v22 = vld [vmem:[%s0 + $0x8] sm:$0xff]
  %v23 = vld [vmem:[%s0 + $0x10] sm:$0xff]
  %v24 = vld [vmem:[%s0 + $0x18] sm:$0xff]
  %v25 = vpack.c.bf16 %v22, %v21
  %v26 = vpack.c.bf16 %v24, %v23
  %v27 = vld [vmem:[%s1] sm:$0xf]
  %v28 = vld [vmem:[%s1 + $0x4] sm:$0xf]
  %v29 = vld [vmem:[%s1 + $0x8] sm:$0xf]
  %v30 = vld [vmem:[%s1 + $0xc] sm:$0xf]
  %v31 = vld [vmem:[%s2] sm:$0x1]
  %v33 = vlaneseq
  %v34 = vshrl.u32 %v33, 7
  %v35 = vsub.s32 0, %v34
  %v36 = vrot.slane %v31, %v35
  %v42 = vunpack.c.l.b16 %v27
  %v43 = vunpack.c.l.b16 %v28
  %v44 = vunpack.c.l.b16 %v29
  %v45 = vunpack.c.l.b16 %v30
  %v46 = vpack.c.b16 %v43, %v42
  %v47 = vpack.c.b16 %v45, %v44
  %vm50 = vcmask 261120
  %v52 = vsel %vm50, %v25, 0
  %v55 = vsel %vm50, %v26, 0
  %57 = vmatprep.subr.bf16.mxu0 0
  %58 = vmatpush1.bf16.msra.mxu0 %v46
  %59 = vmatprep.subr.bf16.mxu0 0
  %60 = vmatpush1.bf16.msra.mxu0 %v47
  %61 = vmatprep.subr.bf16.mxu0 0
  %62 = vmatpush1.bf16.msra.mxu0 0
  %63 = vmatprep.subr.bf16.mxu0 0
  %64 = vmatpush1.bf16.msra.mxu0 0
  %65 = vmatprep.subr.bf16.mxu0 0
  %66 = vmatpush1.bf16.msra.mxu0 0
  %67 = vmatprep.subr.bf16.mxu0 0
  %68 = vmatpush1.bf16.msra.mxu0 0
  %69 = vmatprep.subr.bf16.mxu0 0
  %70 = vmatpush1.bf16.msra.mxu0 0
  %71 = vmatprep.subr.bf16.mxu0 0
  %72 = vmatpush1.bf16.msra.mxu0 0
  %73 = vmatprep.subr.bf16.mxu0 0
  %74 = vmatpush1.bf16.msra.mxu0 0
  %75 = vmatprep.subr.bf16.mxu0 0
  %76 = vmatpush1.bf16.msra.mxu0 0
  %77 = vmatprep.subr.bf16.mxu0 0
  %78 = vmatpush1.bf16.msra.mxu0 0
  %79 = vmatprep.subr.bf16.mxu0 0
  %80 = vmatpush1.bf16.msra.mxu0 0
  %81 = vmatprep.subr.bf16.mxu0 0
  %82 = vmatpush1.bf16.msra.mxu0 0
  %83 = vmatprep.subr.bf16.mxu0 0
  %84 = vmatpush1.bf16.msra.mxu0 0
  %85 = vmatprep.subr.bf16.mxu0 0
  %86 = vmatpush1.bf16.msra.mxu0 0
  %87 = vmatprep.subr.bf16.mxu0 0
  %88 = vmatpush1.bf16.msra.mxu0 0
  %89 = vmatprep.mubr.bf16.mxu0 0
  %90 = vmatmul.mubr.bf16.gmra.mrb[0].mxu0 %v52
  %v91 = vpop.f32.mrb[0].mxu0
  %v92 = vadd.f32 %v36, %v91
  %v93 = vpop.f32.mrb[0].mxu0
  %v94 = vpop.f32.mrb[0].mxu0
  %v95 = vadd.f32 %v36, %v94
  %v96 = vpop.f32.mrb[0].mxu0
  %97 = vmatprep.mubr.bf16.mxu0 0
  %98 = vmatmul.mubr.bf16.gmra.mrb[0].mxu0 %v55
  %v99 = vpop.f32.mrb[0].mxu0
  %v100 = vadd.f32 %v36, %v99
  %v101 = vpop.f32.mrb[0].mxu0
  %v102 = vpop.f32.mrb[0].mxu0
  %v103 = vadd.f32 %v36, %v102
  %v104 = vpop.f32.mrb[0].mxu0
  %105 = vdwg.mxu0
  %vm106 = vcmp.ge.f32.partialorder %v92, 0.0
  %vm107 = vcmp.ge.f32.partialorder %v95, 0.0
  %vm108 = vcmp.ge.f32.partialorder %v100, 0.0
  %vm109 = vcmp.ge.f32.partialorder %v103, 0.0
  %v110 = vmul.f32 %v92, 0.01
  %v111 = vmul.f32 %v95, 0.01
  %v112 = vmul.f32 %v100, 0.01
  %v113 = vmul.f32 %v103, 0.01
  %v114 = vsel %vm106, %v92, %v110
  %v115 = vsel %vm107, %v95, %v111
  %v116 = vsel %vm108, %v100, %v112
  %v117 = vsel %vm109, %v103, %v113
  %v118 = vpack.c.bf16 %v115, %v114
  %v119 = vpack.c.bf16 %v117, %v116
  %v120 = vld [vmem:[%s3] sm:$0xf]
  %v121 = vld [vmem:[%s3 + $0x4] sm:$0xf]
  %v122 = vld [vmem:[%s4] sm:$0x1]
  %v124 = vlaneseq
  %v125 = vshrl.u32 %v124, 7
  %v126 = vsub.s32 0, %v125
  %v127 = vrot.slane %v122, %v126
  %v131 = vunpack.c.l.b16 %v120
  %v132 = vunpack.c.l.b16 %v121
  %v133 = vpack.c.b16 %v132, %v131
  %vm135 = vcmask 130048
  %v137 = vsel %vm135, %v118, 0
  %v140 = vsel %vm135, %v119, 0
  %142 = vmatprep.subr.bf16.mxu0 0
  %143 = vmatpush1.bf16.msra.mxu0 %v133
  %144 = vmatprep.subr.bf16.mxu0 0
  %145 = vmatpush1.bf16.msra.mxu0 0
  %146 = vmatprep.subr.bf16.mxu0 0
  %147 = vmatpush1.bf16.msra.mxu0 0
  %148 = vmatprep.subr.bf16.mxu0 0
  %149 = vmatpush1.bf16.msra.mxu0 0
  %150 = vmatprep.subr.bf16.mxu0 0
  %151 = vmatpush1.bf16.msra.mxu0 0
  %152 = vmatprep.subr.bf16.mxu0 0
  %153 = vmatpush1.bf16.msra.mxu0 0
  %154 = vmatprep.subr.bf16.mxu0 0
  %155 = vmatpush1.bf16.msra.mxu0 0
  %156 = vmatprep.subr.bf16.mxu0 0
  %157 = vmatpush1.bf16.msra.mxu0 0
  %158 = vmatprep.subr.bf16.mxu0 0
  %159 = vmatpush1.bf16.msra.mxu0 0
  %160 = vmatprep.subr.bf16.mxu0 0
  %161 = vmatpush1.bf16.msra.mxu0 0
  %162 = vmatprep.subr.bf16.mxu0 0
  %163 = vmatpush1.bf16.msra.mxu0 0
  %164 = vmatprep.subr.bf16.mxu0 0
  %165 = vmatpush1.bf16.msra.mxu0 0
  %166 = vmatprep.subr.bf16.mxu0 0
  %167 = vmatpush1.bf16.msra.mxu0 0
  %168 = vmatprep.subr.bf16.mxu0 0
  %169 = vmatpush1.bf16.msra.mxu0 0
  %170 = vmatprep.subr.bf16.mxu0 0
  %171 = vmatpush1.bf16.msra.mxu0 0
  %172 = vmatprep.subr.bf16.mxu0 0
  %173 = vmatpush1.bf16.msra.mxu0 0
  %174 = vmatprep.mubr.bf16.mxu0 0
  %175 = vmatmul.mubr.bf16.gmra.mrb[0].mxu0 %v137
  %v176 = vpop.f32.mrb[0].mxu0
  %v177 = vadd.f32 %v127, %v176
  %v178 = vpop.f32.mrb[0].mxu0
  %v179 = vpop.f32.mrb[0].mxu0
  %v180 = vadd.f32 %v127, %v179
  %v181 = vpop.f32.mrb[0].mxu0
  %182 = vmatprep.mubr.bf16.mxu0 0
  %183 = vmatmul.mubr.bf16.gmra.mrb[0].mxu0 %v140
  %v184 = vpop.f32.mrb[0].mxu0
  %v185 = vadd.f32 %v127, %v184
  %v186 = vpop.f32.mrb[0].mxu0
  %v187 = vpop.f32.mrb[0].mxu0
  %v188 = vadd.f32 %v127, %v187
  %v189 = vpop.f32.mrb[0].mxu0
  %190 = vdwg.mxu0
  %vm191 = vcmp.ge.f32.partialorder %v177, 0.0
  %vm192 = vcmp.ge.f32.partialorder %v180, 0.0
  %vm193 = vcmp.ge.f32.partialorder %v185, 0.0
  %vm194 = vcmp.ge.f32.partialorder %v188, 0.0
  %v195 = vmul.f32 %v177, 0.01
  %v196 = vmul.f32 %v180, 0.01
  %v197 = vmul.f32 %v185, 0.01
  %v198 = vmul.f32 %v188, 0.01
  %v199 = vsel %vm191, %v177, %v195
  %v200 = vsel %vm192, %v180, %v196
  %v201 = vsel %vm193, %v185, %v197
  %v202 = vsel %vm194, %v188, %v198
  %vm203 = vcmask 64512
  %204 = vst.msk [vmem:[%s5] sm:$0xff] %vm203, %v199
  %205 = vst.msk [vmem:[%s5 + $0x8] sm:$0xff] %vm203, %v200
  %206 = vst.msk [vmem:[%s5 + $0x10] sm:$0xff] %vm203, %v201
  %207 = vst.msk [vmem:[%s5 + $0x18] sm:$0xff] %vm203, %v202
  // Predicated region
  $region22: #{_forward_impl.1} parent=0 // pred_check
    _
  $region23: #{_forward_impl.1} parent=0 // pred_check_branch
    %209 = sbr.rel (0) target = $region25
  $region24: #{_forward_impl.1} parent=0 // pred_region
    _
  $region25: #{_forward_impl.1} parent=0 // pred_fallthru
    _
  // Predicated region
  $region26: #{_forward_impl.1} parent=0 // pred_check
    _
  $region27: #{_forward_impl.1} parent=0 // pred_check_branch
    %211 = sbr.rel (0) target = $region29
  $region28: #{_forward_impl.1} parent=0 // pred_region
    _
  $region29: #{_forward_impl.1} parent=0 // pred_fallthru
    _

// kernel: _forward_impl.1
$region0: #{_forward_impl.1}
  #allocation0 [shape = 'u32[]', space=smem, size = 0x4, offset = 0x4, fixed_abs, tag = 'smem constant byte address 0x4 - core index']
  #allocation1 [shape = 'u32[144,128]{1,0:T(1,128)}', space=vmem, size = 0x12000, scoped, tag = 'internal scratch']
  %s0 = inlined_call_operand.vmem [shape: f32[32,32], index: 0, kind: input, shape index: {}]
  %s1 = inlined_call_operand.vmem [shape: bf16[32,16], index: 1, kind: input, shape index: {}]
  %s2 = inlined_call_operand.vmem [shape: f32[1,16], index: 2, kind: input, shape index: {}]
  %s3 = inlined_call_operand.vmem [shape: bf16[16,8], index: 3, kind: input, shape index: {}]
  %s4 = inlined_call_operand.vmem [shape: f32[1,8], index: 4, kind: input, shape index: {}]
  %s5 = inlined_call_operand.vmem [shape: f32[32,8], index: 5, kind: output, shape index: {}]
  %s6 = sld [smem:[#allocation0]]
  $region30: #{_forward_impl.1} parent=0
    _
  %s8 = ssub.s32 1, %s6
  %s9 = scalar_select 0, %s8, %s6
  // Predicated region
  $region2: #{_forward_impl.1} parent=0 // pred_check
    _
  $region3: #{_forward_impl.1} parent=0 // pred_check_branch
    %11 = sbr.rel (0) target = $region5
  $region4: #{_forward_impl.1} parent=0 // pred_region
    _
  $region5: #{_forward_impl.1} parent=0 // pred_fallthru
    _
  // Predicated region
  $region6: #{_forward_impl.1} parent=0 // pred_check
    _
  $region7: #{_forward_impl.1} parent=0 // pred_check_branch
    %13 = sbr.rel (0) target = $region9
  $region8: #{_forward_impl.1} parent=0 // pred_region
    _
  $region9: #{_forward_impl.1} parent=0 // pred_fallthru
    _
  // Predicated region
  $region10: #{_forward_impl.1} parent=0 // pred_check
    _
  $region11: #{_forward_impl.1} parent=0 // pred_check_branch
    %15 = sbr.rel (0) target = $region13
  $region12: #{_forward_impl.1} parent=0 // pred_region
    _
  $region13: #{_forward_impl.1} parent=0 // pred_fallthru
    _
  // Predicated region
  $region14: #{_forward_impl.1} parent=0 // pred_check
    _
  $region15: #{_forward_impl.1} parent=0 // pred_check_branch
    %17 = sbr.rel (0) target = $region17
  $region16: #{_forward_impl.1} parent=0 // pred_region
    _
  $region17: #{_forward_impl.1} parent=0 // pred_fallthru
    _
  // Predicated region
  $region18: #{_forward_impl.1} parent=0 // pred_check
    _
  $region19: #{_forward_impl.1} parent=0 // pred_check_branch
    %19 = sbr.rel (0) target = $region21
  $region20: #{_forward_impl.1} parent=0 // pred_region
    _
  $region21: #{_forward_impl.1} parent=0 // pred_fallthru
    _
  %v21 = vld [vmem:[%s0] sm:$0xff]
  %v22 = vld [vmem:[%s0 + $0x8] sm:$0xff]
  %v23 = vld [vmem:[%s0 + $0x10] sm:$0xff]
  %v24 = vld [vmem:[%s0 + $0x18] sm:$0xff]
  %v25 = vpack.c.bf16 %v22, %v21
  %v26 = vpack.c.bf16 %v24, %v23
  %v27 = vld [vmem:[%s1] sm:$0xf]
  %v28 = vld [vmem:[%s1 + $0x4] sm:$0xf]
  %v29 = vld [vmem:[%s1 + $0x8] sm:$0xf]
  %v30 = vld [vmem:[%s1 + $0xc] sm:$0xf]
  %v31 = vld [vmem:[%s2] sm:$0x1]
  %v33 = vlaneseq
  %v34 = vshrl.u32 %v33, 7
  %v35 = vsub.s32 0, %v34
  %v36 = vrot.slane %v31, %v35
  %v42 = vunpack.c.l.b16 %v27
  %v43 = vunpack.c.l.b16 %v28
  %v44 = vunpack.c.l.b16 %v29
  %v45 = vunpack.c.l.b16 %v30
  %v46 = vpack.c.b16 %v43, %v42
  %v47 = vpack.c.b16 %v45, %v44
  %vm50 = vcmask 261120
  %v52 = vsel %vm50, %v25, 0
  %v55 = vsel %vm50, %v26, 0
  %57 = vmatprep.subr.bf16.mxu0 0
  %58 = vmatpush1.bf16.msra.mxu0 %v46
  %59 = vmatprep.subr.bf16.mxu0 0
  %60 = vmatpush1.bf16.msra.mxu0 %v47
  %61 = vmatprep.subr.bf16.mxu0 0
  %62 = vmatpush1.bf16.msra.mxu0 0
  %63 = vmatprep.subr.bf16.mxu0 0
  %64 = vmatpush1.bf16.msra.mxu0 0
  %65 = vmatprep.subr.bf16.mxu0 0
  %66 = vmatpush1.bf16.msra.mxu0 0
  %67 = vmatprep.subr.bf16.mxu0 0
  %68 = vmatpush1.bf16.msra.mxu0 0
  %69 = vmatprep.subr.bf16.mxu0 0
  %70 = vmatpush1.bf16.msra.mxu0 0
  %71 = vmatprep.subr.bf16.mxu0 0
  %72 = vmatpush1.bf16.msra.mxu0 0
  %73 = vmatprep.subr.bf16.mxu0 0
  %74 = vmatpush1.bf16.msra.mxu0 0
  %75 = vmatprep.subr.bf16.mxu0 0
  %76 = vmatpush1.bf16.msra.mxu0 0
  %77 = vmatprep.subr.bf16.mxu0 0
  %78 = vmatpush1.bf16.msra.mxu0 0
  %79 = vmatprep.subr.bf16.mxu0 0
  %80 = vmatpush1.bf16.msra.mxu0 0
  %81 = vmatprep.subr.bf16.mxu0 0
  %82 = vmatpush1.bf16.msra.mxu0 0
  %83 = vmatprep.subr.bf16.mxu0 0
  %84 = vmatpush1.bf16.msra.mxu0 0
  %85 = vmatprep.subr.bf16.mxu0 0
  %86 = vmatpush1.bf16.msra.mxu0 0
  %87 = vmatprep.subr.bf16.mxu0 0
  %88 = vmatpush1.bf16.msra.mxu0 0
  %89 = vmatprep.mubr.bf16.mxu0 0
  %90 = vmatmul.mubr.bf16.gmra.mrb[0].mxu0 %v52
  %v91 = vpop.f32.mrb[0].mxu0
  %v92 = vadd.f32 %v36, %v91
  %v93 = vpop.f32.mrb[0].mxu0
  %v94 = vpop.f32.mrb[0].mxu0
  %v95 = vadd.f32 %v36, %v94
  %v96 = vpop.f32.mrb[0].mxu0
  %97 = vmatprep.mubr.bf16.mxu0 0
  %98 = vmatmul.mubr.bf16.gmra.mrb[0].mxu0 %v55
  %v99 = vpop.f32.mrb[0].mxu0
  %v100 = vadd.f32 %v36, %v99
  %v101 = vpop.f32.mrb[0].mxu0
  %v102 = vpop.f32.mrb[0].mxu0
  %v103 = vadd.f32 %v36, %v102
  %v104 = vpop.f32.mrb[0].mxu0
  %105 = vdwg.mxu0
  %vm106 = vcmp.ge.f32.partialorder %v92, 0.0
  %vm107 = vcmp.ge.f32.partialorder %v95, 0.0
  %vm108 = vcmp.ge.f32.partialorder %v100, 0.0
  %vm109 = vcmp.ge.f32.partialorder %v103, 0.0
  %v110 = vmul.f32 %v92, 0.01
  %v111 = vmul.f32 %v95, 0.01
  %v112 = vmul.f32 %v100, 0.01
  %v113 = vmul.f32 %v103, 0.01
  %v114 = vsel %vm106, %v92, %v110
  %v115 = vsel %vm107, %v95, %v111
  %v116 = vsel %vm108, %v100, %v112
  %v117 = vsel %vm109, %v103, %v113
  %v118 = vpack.c.bf16 %v115, %v114
  %v119 = vpack.c.bf16 %v117, %v116
  %v120 = vld [vmem:[%s3] sm:$0xf]
  %v121 = vld [vmem:[%s3 + $0x4] sm:$0xf]
  %v122 = vld [vmem:[%s4] sm:$0x1]
  %v124 = vlaneseq
  %v125 = vshrl.u32 %v124, 7
  %v126 = vsub.s32 0, %v125
  %v127 = vrot.slane %v122, %v126
  %v131 = vunpack.c.l.b16 %v120
  %v132 = vunpack.c.l.b16 %v121
  %v133 = vpack.c.b16 %v132, %v131
  %vm135 = vcmask 130048
  %v137 = vsel %vm135, %v118, 0
  %v140 = vsel %vm135, %v119, 0
  %142 = vmatprep.subr.bf16.mxu0 0
  %143 = vmatpush1.bf16.msra.mxu0 %v133
  %144 = vmatprep.subr.bf16.mxu0 0
  %145 = vmatpush1.bf16.msra.mxu0 0
  %146 = vmatprep.subr.bf16.mxu0 0
  %147 = vmatpush1.bf16.msra.mxu0 0
  %148 = vmatprep.subr.bf16.mxu0 0
  %149 = vmatpush1.bf16.msra.mxu0 0
  %150 = vmatprep.subr.bf16.mxu0 0
  %151 = vmatpush1.bf16.msra.mxu0 0
  %152 = vmatprep.subr.bf16.mxu0 0
  %153 = vmatpush1.bf16.msra.mxu0 0
  %154 = vmatprep.subr.bf16.mxu0 0
  %155 = vmatpush1.bf16.msra.mxu0 0
  %156 = vmatprep.subr.bf16.mxu0 0
  %157 = vmatpush1.bf16.msra.mxu0 0
  %158 = vmatprep.subr.bf16.mxu0 0
  %159 = vmatpush1.bf16.msra.mxu0 0
  %160 = vmatprep.subr.bf16.mxu0 0
  %161 = vmatpush1.bf16.msra.mxu0 0
  %162 = vmatprep.subr.bf16.mxu0 0
  %163 = vmatpush1.bf16.msra.mxu0 0
  %164 = vmatprep.subr.bf16.mxu0 0
  %165 = vmatpush1.bf16.msra.mxu0 0
  %166 = vmatprep.subr.bf16.mxu0 0
  %167 = vmatpush1.bf16.msra.mxu0 0
  %168 = vmatprep.subr.bf16.mxu0 0
  %169 = vmatpush1.bf16.msra.mxu0 0
  %170 = vmatprep.subr.bf16.mxu0 0
  %171 = vmatpush1.bf16.msra.mxu0 0
  %172 = vmatprep.subr.bf16.mxu0 0
  %173 = vmatpush1.bf16.msra.mxu0 0
  %174 = vmatprep.mubr.bf16.mxu0 0
  %175 = vmatmul.mubr.bf16.gmra.mrb[0].mxu0 %v137
  %v176 = vpop.f32.mrb[0].mxu0
  %v177 = vadd.f32 %v127, %v176
  %v178 = vpop.f32.mrb[0].mxu0
  %v179 = vpop.f32.mrb[0].mxu0
  %v180 = vadd.f32 %v127, %v179
  %v181 = vpop.f32.mrb[0].mxu0
  %182 = vmatprep.mubr.bf16.mxu0 0
  %183 = vmatmul.mubr.bf16.gmra.mrb[0].mxu0 %v140
  %v184 = vpop.f32.mrb[0].mxu0
  %v185 = vadd.f32 %v127, %v184
  %v186 = vpop.f32.mrb[0].mxu0
  %v187 = vpop.f32.mrb[0].mxu0
  %v188 = vadd.f32 %v127, %v187
  %v189 = vpop.f32.mrb[0].mxu0
  %190 = vdwg.mxu0
  %vm191 = vcmp.ge.f32.partialorder %v177, 0.0
  %vm192 = vcmp.ge.f32.partialorder %v180, 0.0
  %vm193 = vcmp.ge.f32.partialorder %v185, 0.0
  %vm194 = vcmp.ge.f32.partialorder %v188, 0.0
  %v195 = vmul.f32 %v177, 0.01
  %v196 = vmul.f32 %v180, 0.01
  %v197 = vmul.f32 %v185, 0.01
  %v198 = vmul.f32 %v188, 0.01
  %v199 = vsel %vm191, %v177, %v195
  %v200 = vsel %vm192, %v180, %v196
  %v201 = vsel %vm193, %v185, %v197
  %v202 = vsel %vm194, %v188, %v198
  %vm203 = vcmask 64512
  %204 = vst.msk [vmem:[%s5] sm:$0xff] %vm203, %v199
  %205 = vst.msk [vmem:[%s5 + $0x8] sm:$0xff] %vm203, %v200
  %206 = vst.msk [vmem:[%s5 + $0x10] sm:$0xff] %vm203, %v201
  %207 = vst.msk [vmem:[%s5 + $0x18] sm:$0xff] %vm203, %v202
  // Predicated region
  $region22: #{_forward_impl.1} parent=0 // pred_check
    _
  $region23: #{_forward_impl.1} parent=0 // pred_check_branch
    %209 = sbr.rel (0) target = $region25
  $region24: #{_forward_impl.1} parent=0 // pred_region
    _
  $region25: #{_forward_impl.1} parent=0 // pred_fallthru
    _
  // Predicated region
  $region26: #{_forward_impl.1} parent=0 // pred_check
    _
  $region27: #{_forward_impl.1} parent=0 // pred_check_branch
    %211 = sbr.rel (0) target = $region29
  $region28: #{_forward_impl.1} parent=0 // pred_region
    _
  $region29: #{_forward_impl.1} parent=0 // pred_fallthru
    _

</llo_original>
